<compile_context>
chip_gen: v6e
topology: v6e:2x2x1
jax: 0.10.0
libtpu: 0.0.40
codegen_flags: <defaults>
</compile_context>

<pallas_src>
import functools

import jax
import jax.numpy as jnp
import numpy as np
from jax import lax
from jax.experimental import pallas as pl
from jax.experimental.pallas import tpu as pltpu

_LANE = 128


def _round_up(x, m):
    return (x + m - 1) // m * m


def _sage_layer_kernel(a_ref, hfull_ref, htile_ref, w_ref, b_ref, o_ref,
                       *, is_output, num_classes):
    """One SAGEConv layer for one row tile of nodes.

    a_ref     : [TM, Np]          bf16  row tile of mean-normalized adjacency
    hfull_ref : [Np, Fin_p]       bf16  full previous-layer activations (agg input)
    htile_ref : [TM, Fin_p]       bf16  row tile of previous activations (self path)
    w_ref     : [2*Fin_p, Fout_p] bf16  stacked [W_l ; W_r] (single fused matmul)
    b_ref     : [1, Fout_p]       f32
    o_ref     : [TM, Fout_p]      bf16 (hidden layers) / f32 (logits layer)
    """
    # neighbor mean aggregation for this row tile (MXU, f32 accumulation)
    agg = jnp.dot(a_ref[...], hfull_ref[...],
                  preferred_element_type=jnp.float32)              # [TM, Fin_p] f32

    # fused (agg @ W_l + h @ W_r): concat on the lane-aligned contraction axis
    cat = jnp.concatenate([agg.astype(jnp.bfloat16), htile_ref[...]], axis=-1)
    out = jnp.dot(cat, w_ref[...],
                  preferred_element_type=jnp.float32) + b_ref[...]  # [TM, Fout_p] f32

    if not is_output:
        # ReLU; zero-padded feature lanes stay exactly zero.
        # TODO(synk): F.dropout between layers is identity in eval mode; omitted.
        o_ref[...] = jnp.maximum(out, 0.0).astype(o_ref.dtype)
    else:
        # masked row-wise log_softmax over the first `num_classes` lanes
        col = lax.broadcasted_iota(jnp.int32, out.shape, 1)
        logits = jnp.where(col < num_classes, out, -1e30)
        m = jnp.max(logits, axis=-1, keepdims=True)
        lse = jnp.log(jnp.sum(jnp.exp(logits - m), axis=-1, keepdims=True)) + m
        o_ref[...] = (logits - lse).astype(o_ref.dtype)


def _vmem_limit_bytes(tm, n_pad, f_in_p, f_out_p):
    bf16, f32 = 2, 4
    need = (2 * tm * n_pad * bf16        # double-buffered A row tiles
            + n_pad * f_in_p * bf16      # resident full activations
            + 2 * tm * f_in_p * bf16     # double-buffered activation row tiles
            + 2 * f_in_p * f_out_p * bf16
            + f_out_p * f32
            + 2 * tm * f_out_p * f32)    # double-buffered output tiles
    # 2x headroom for Mosaic internal scratch; clamp to a budget safe on
    # v5e/v6e (128 MiB physical) and v7x (64 MiB physical).
    return int(min(max(2 * need, 16 * 1024 * 1024), 40 * 1024 * 1024))


def _sage_layer(a, h, w, b, *, tm, is_output, num_classes):
    n_pad, f_in_p = h.shape
    f_out_p = w.shape[1]
    out_dtype = jnp.float32 if is_output else jnp.bfloat16
    kernel = functools.partial(_sage_layer_kernel,
                               is_output=is_output, num_classes=num_classes)
    return pl.pallas_call(
        kernel,
        out_shape=jax.ShapeDtypeStruct((n_pad, f_out_p), out_dtype),
        grid_spec=pltpu.PrefetchScalarGridSpec(
            num_scalar_prefetch=0,
            grid=(n_pad // tm,),
            in_specs=[
                pl.BlockSpec((tm, n_pad), lambda i: (i, 0)),        # A row tile
                pl.BlockSpec((n_pad, f_in_p), lambda i: (0, 0)),    # full h (resident)
                pl.BlockSpec((tm, f_in_p), lambda i: (i, 0)),       # h row tile (self)
                pl.BlockSpec((2 * f_in_p, f_out_p), lambda i: (0, 0)),
                pl.BlockSpec((1, f_out_p), lambda i: (0, 0)),
            ],
            out_specs=pl.BlockSpec((tm, f_out_p), lambda i: (i, 0)),
        ),
        compiler_params=pltpu.CompilerParams(
            # independent row tiles -> v7x's two TensorCores split the grid
            dimension_semantics=("parallel",),
            vmem_limit_bytes=_vmem_limit_bytes(tm, n_pad, f_in_p, f_out_p),
        ),
    )(a, h, h, w, b)


def _pack_layer(wl, wr, b):
    """Stack [W_l ; W_r] for the fused matmul; zero-pad feature dims to 128 lanes."""
    f_in, f_out = wl.shape
    f_in_p = _round_up(f_in, _LANE)
    f_out_p = _round_up(f_out, _LANE)
    w = jnp.zeros((2 * f_in_p, f_out_p), jnp.float32)
    w = w.at[:f_in, :f_out].set(wl)                       # rows multiplying agg
    w = w.at[f_in_p:f_in_p + f_in, :f_out].set(wr)        # rows multiplying self h
    b_p = jnp.zeros((1, f_out_p), jnp.float32).at[:, :f_out].set(
        jnp.asarray(b, jnp.float32).reshape(1, f_out))
    return w.astype(jnp.bfloat16), b_p


def graphsage_forward(adj, x, params):
    """adj: [N, N] mean-normalized adjacency (A[i, j] = 1/deg(i) for edge j -> i).
    x: [N, F_in]. params: list of (W_l [in,out], W_r [in,out], bias [1,out])."""
    n = x.shape[0]
    num_classes = params[-1][0].shape[1]

    # row-tile size: whole graph when small, else 512-row tiles (pad N to match)
    if n <= 512:
        tm, n_pad = n, n
    else:
        tm = 512
        n_pad = _round_up(n, tm)

    f_in = x.shape[1]
    f_in_p = _round_up(f_in, _LANE)

    a = (jnp.zeros((n_pad, n_pad), jnp.float32)
         .at[:n, :n].set(adj).astype(jnp.bfloat16))
    h = (jnp.zeros((n_pad, f_in_p), jnp.float32)
         .at[:n, :f_in].set(x).astype(jnp.bfloat16))

    # TODO(synk): for realistically sparse graphs replace the dense O(N^2)
    # adjacency matmul with a scalar-prefetch gather + segment-mean kernel.
    for li, (wl, wr, b) in enumerate(params):
        is_output = li == len(params) - 1
        w_p, b_p = _pack_layer(wl, wr, b)
        h = _sage_layer(a, h, w_p, b_p, tm=tm,
                        is_output=is_output, num_classes=num_classes)
    return h[:n, :num_classes]


def _reference(adj, x, params):
    # mirrors the kernel's bf16-input / f32-accumulation numerics
    a = adj.astype(jnp.bfloat16)
    h = x.astype(jnp.bfloat16)
    out = None
    for li, (wl, wr, b) in enumerate(params):
        agg = jnp.dot(a, h, preferred_element_type=jnp.float32).astype(jnp.bfloat16)
        out = (jnp.dot(agg, wl.astype(jnp.bfloat16), preferred_element_type=jnp.float32)
               + jnp.dot(h, wr.astype(jnp.bfloat16), preferred_element_type=jnp.float32)
               + b)
        if li < len(params) - 1:
            h = jnp.maximum(out, 0.0).astype(jnp.bfloat16)
    return jax.nn.log_softmax(out, axis=1)


def _init_linear(key, fan_in, fan_out):
    limit = float(np.sqrt(6.0 / (fan_in + fan_out)))
    return jax.random.uniform(key, (fan_in, fan_out), jnp.float32, -limit, limit)


if __name__ == "__main__":
    key = jax.random.PRNGKey(0)

    # small synthetic graph
    N = 64            # nodes
    F_IN = 16         # dataset.num_features
    HIDDEN = 32       # hidden channels
    C = 8             # dataset.num_classes
    E = 256           # edges

    k_x, k_src, k_dst, *k_w = jax.random.split(key, 4 + 9)

    x = jax.random.normal(k_x, (N, F_IN), jnp.float32)
    src = jax.random.randint(k_src, (E,), 0, N)
    dst = jax.random.randint(k_dst, (E,), 0, N)

    # dense mean-normalized adjacency: A[i, j] = 1/deg(i) for edge j -> i
    adj_counts = jnp.zeros((N, N), jnp.float32).at[dst, src].add(1.0)
    deg = jnp.sum(adj_counts, axis=1, keepdims=True)
    adj = adj_counts / jnp.maximum(deg, 1.0)

    # SAGEConv params: (W_l [in,out], W_r [in,out], bias [1,out]) per layer
    dims = [(F_IN, HIDDEN), (HIDDEN, HIDDEN), (HIDDEN, C)]
    params = []
    for li, (fi, fo) in enumerate(dims):
        wl = _init_linear(k_w[3 * li + 0], fi, fo)
        wr = _init_linear(k_w[3 * li + 1], fi, fo)
        b = 0.01 * jax.random.normal(k_w[3 * li + 2], (1, fo), jnp.float32)
        params.append((wl, wr, b))

    out = graphsage_forward(adj, x, params)
    out = jax.block_until_ready(out)

    ref = _reference(adj, x, params)
    np.testing.assert_allclose(np.asarray(out), np.asarray(ref),
                               rtol=2e-2, atol=2e-2)

    print("KERNEL_OK")
</pallas_src>

<mosaic_0001>
module attributes {stable_mosaic.version = 11 : i64} {
  func.func @_sage_layer_kernel(%arg0: i32, %arg1: memref<64x64xbf16, #tpu.memory_space<vmem>>, %arg2: memref<64x128xbf16, #tpu.memory_space<vmem>>, %arg3: memref<64x128xbf16, #tpu.memory_space<vmem>>, %arg4: memref<256x128xbf16, #tpu.memory_space<vmem>>, %arg5: memref<1x128xf32, #tpu.memory_space<vmem>>, %arg6: memref<64x128xbf16, #tpu.memory_space<vmem>>) attributes {dimension_semantics = [#tpu.dimension_semantics<parallel>], iteration_bounds = array<i64: 1>, scalar_prefetch = 0 : i64, scratch_operands = 0 : i64, tpu.core_type = #tpu.core_type<tc>, window_params = [{transform_indices = @transform_0, window_bounds = array<i64: 64, 64>}, {pipeline_mode = #tpu.pipeline_mode<synchronous>, transform_indices = @transform_1, window_bounds = array<i64: 64, 128>}, {transform_indices = @transform_2, window_bounds = array<i64: 64, 128>}, {pipeline_mode = #tpu.pipeline_mode<synchronous>, transform_indices = @transform_3, window_bounds = array<i64: 256, 128>}, {pipeline_mode = #tpu.pipeline_mode<synchronous>, transform_indices = @transform_4, window_bounds = array<i64: 1, 128>}, {transform_indices = @transform_5, window_bounds = array<i64: 64, 128>}]} {
    %c0 = arith.constant 0 : index
    %c0_0 = arith.constant 0 : index
    %0 = vector.load %arg1[%c0, %c0_0] : memref<64x64xbf16, #tpu.memory_space<vmem>>, vector<64x64xbf16>
    %c0_1 = arith.constant 0 : index
    %c0_2 = arith.constant 0 : index
    %1 = vector.load %arg2[%c0_1, %c0_2] : memref<64x128xbf16, #tpu.memory_space<vmem>>, vector<64x128xbf16>
    %cst = arith.constant dense<0.000000e+00> : vector<64x128xf32>
    %2 = tpu.matmul %0, %1, %cst {dimension_numbers = #tpu.dot_dimension_numbers<[1], [0], [0], [1], [0, 0, 1, 1], [], []>} : vector<64x64xbf16>, vector<64x128xbf16>, vector<64x128xf32> -> vector<64x128xf32>
    %3 = arith.truncf %2 : vector<64x128xf32> to vector<64x128xbf16>
    %c0_3 = arith.constant 0 : index
    %c0_4 = arith.constant 0 : index
    %4 = vector.load %arg3[%c0_3, %c0_4] : memref<64x128xbf16, #tpu.memory_space<vmem>>, vector<64x128xbf16>
    %5 = tpu.concatenate %3, %4 in 1 : vector<64x128xbf16>, vector<64x128xbf16> -> vector<64x256xbf16>
    %c0_5 = arith.constant 0 : index
    %c0_6 = arith.constant 0 : index
    %6 = vector.load %arg4[%c0_5, %c0_6] : memref<256x128xbf16, #tpu.memory_space<vmem>>, vector<256x128xbf16>
    %cst_7 = arith.constant dense<0.000000e+00> : vector<64x128xf32>
    %7 = tpu.matmul %5, %6, %cst_7 {dimension_numbers = #tpu.dot_dimension_numbers<[1], [0], [0], [1], [0, 0, 1, 1], [], []>} : vector<64x256xbf16>, vector<256x128xbf16>, vector<64x128xf32> -> vector<64x128xf32>
    %c0_8 = arith.constant 0 : index
    %c0_9 = arith.constant 0 : index
    %8 = vector.load %arg5[%c0_8, %c0_9] : memref<1x128xf32, #tpu.memory_space<vmem>>, vector<1x128xf32>
    %9 = vector.broadcast %8 : vector<1x128xf32> to vector<64x128xf32>
    %10 = arith.addf %7, %9 : vector<64x128xf32>
    %cst_10 = arith.constant 0.000000e+00 : f32
    %11 = vector.broadcast %cst_10 : f32 to vector<64x128xf32>
    %12 = arith.maximumf %10, %11 : vector<64x128xf32>
    %13 = arith.truncf %12 : vector<64x128xf32> to vector<64x128xbf16>
    %c0_11 = arith.constant 0 : index
    %c0_12 = arith.constant 0 : index
    %14 = vector.load %arg6[%c0_11, %c0_12] : memref<64x128xbf16, #tpu.memory_space<vmem>>, vector<64x128xbf16>
    tpu.vector_store %arg6[%c0_11, %c0_12], %13 {strides = array<i32>} : memref<64x128xbf16, #tpu.memory_space<vmem>>, vector<64x128xbf16>,
    return
  }
  func.func @transform_0(%arg0: i32) -> (i32, i32) {
    %c0_i32 = arith.constant 0 : i32
    %c0_i32_0 = arith.constant 0 : i32
    return %arg0, %c0_i32 : i32, i32
  }
  func.func @transform_1(%arg0: i32) -> (i32, i32) {
    %c0_i32 = arith.constant 0 : i32
    %c0_i32_0 = arith.constant 0 : i32
    %c0_i32_1 = arith.constant 0 : i32
    return %c0_i32, %c0_i32_0 : i32, i32
  }
  func.func @transform_2(%arg0: i32) -> (i32, i32) {
    %c0_i32 = arith.constant 0 : i32
    %c0_i32_0 = arith.constant 0 : i32
    return %arg0, %c0_i32 : i32, i32
  }
  func.func @transform_3(%arg0: i32) -> (i32, i32) {
    %c0_i32 = arith.constant 0 : i32
    %c0_i32_0 = arith.constant 0 : i32
    %c0_i32_1 = arith.constant 0 : i32
    return %c0_i32, %c0_i32_0 : i32, i32
  }
  func.func @transform_4(%arg0: i32) -> (i32, i32) {
    %c0_i32 = arith.constant 0 : i32
    %c0_i32_0 = arith.constant 0 : i32
    %c0_i32_1 = arith.constant 0 : i32
    return %c0_i32, %c0_i32_0 : i32, i32
  }
  func.func @transform_5(%arg0: i32) -> (i32, i32) {
    %c0_i32 = arith.constant 0 : i32
    %c0_i32_0 = arith.constant 0 : i32
    return %arg0, %c0_i32 : i32, i32
  }
}

</mosaic_0001>

<llo_original>
// kernel: tpu_custom_call.1
$region0: #{tpu_custom_call.1}
  #allocation0 [shape = 'u32[]', space=smem, size = 0x4, offset = 0x4, fixed_abs, tag = 'smem constant byte address 0x4 - core index']
  #allocation1 [shape = 'u32[144,128]{1,0:T(1,128)}', space=vmem, size = 0x12000, scoped, tag = 'internal scratch']
  %s0 = inlined_call_operand.hbm [shape: bf16[64,64], index: 0, kind: input, shape index: {}]
  %s1 = inlined_call_operand.hbm [shape: bf16[64,128], index: 1, kind: input, shape index: {}]
  %s2 = inlined_call_operand.hbm [shape: bf16[64,128], index: 2, kind: input, shape index: {}]
  %s3 = inlined_call_operand.hbm [shape: bf16[256,128], index: 3, kind: input, shape index: {}]
  %s4 = inlined_call_operand.vmem [shape: f32[1,128], index: 4, kind: input, shape index: {}]
  %s5 = inlined_call_operand.hbm [shape: bf16[64,128], index: 5, kind: output, shape index: {}]
  %s6 = sld [smem:[#allocation0]]
  $region46: #{tpu_custom_call.1} parent=0
    _
  %s8 = ssub.s32 1, %s6
  %s9 = scalar_select 0, %s8, %s6
  $region1: #{tpu_custom_call.1} parent=0
    #allocation2 [shape = 'u8[16384]{0}', space=vmem, size = 0x4000, scoped, tag = 'input window, operand 0, single buffered']
    #allocation3 [shape = 's32[1]{0}', space=sflag, size = 0x4, scoped, tag = 'scoped memory for tpu_custom_call.1']
    #allocation4 [shape = 's32[1]{0}', space=sflag, size = 0x4, scoped, tag = 'scoped memory for tpu_custom_call.1']
    #allocation5 [shape = 'u8[16384]{0}', space=vmem, size = 0x4000, scoped, tag = 'input window, operand 1, single buffered']
    #allocation6 [shape = 's32[1]{0}', space=sflag, size = 0x4, scoped, tag = 'scoped memory for tpu_custom_call.1']
    #allocation7 [shape = 'u8[16384]{0}', space=vmem, size = 0x4000, scoped, tag = 'input window, operand 2, single buffered']
    #allocation8 [shape = 'u8[65536]{0}', space=vmem, size = 0x10000, scoped, tag = 'input window, operand 3, single buffered']
    #allocation9 [shape = 's32[1]{0}', space=sflag, size = 0x4, scoped, tag = 'scoped memory for tpu_custom_call.1']
    #allocation10 [shape = 'u8[16384]{0}', space=vmem, size = 0x4000, scoped, tag = 'output window, operand 0, single buffered']
    %10 = vsyncpa [#allocation3], 0
    %11 = vsyncpa [#allocation6], 0
    %12 = vsyncpa [#allocation9], 0
    %13 = vsyncpa [#allocation4], 0
    // Predicated region
    $region2: #{tpu_custom_call.1} parent=1 // pred_check
      _
    $region3: #{tpu_custom_call.1} parent=1 // pred_check_branch
      %15 = sbr.rel (0) target = $region5
    $region4: #{tpu_custom_call.1} parent=1 // pred_region
      %s17 = ssub.s32 512, 512
      %18 = vsyncadd [#allocation3], %s17
      %s19 = sshll.u32 [#allocation2], 4
      %s20 = int_to_ptr.vmem [resolvable:$true] %s19
      %25 = dma.hbm_to_vmem [thread:$0]  %s0, 512, %s20, [#allocation3], 64, 64, 4
    $region5: #{tpu_custom_call.1} parent=1 // pred_fallthru
      _
    // Predicated region
    $region6: #{tpu_custom_call.1} parent=1 // pred_check
      _
    $region7: #{tpu_custom_call.1} parent=1 // pred_check_branch
      %27 = sbr.rel (0) target = $region9
    $region8: #{tpu_custom_call.1} parent=1 // pred_region
      %s29 = ssub.s32 512, 512
      %30 = vsyncadd [#allocation6], %s29
      %s31 = sshll.u32 [#allocation5], 4
      %s32 = int_to_ptr.vmem [resolvable:$true] %s31
      %37 = dma.hbm_to_vmem [thread:$0]  %s1, 512, %s32, [#allocation6], 64, 64, 4
    $region9: #{tpu_custom_call.1} parent=1 // pred_fallthru
      _
    // Predicated region
    $region10: #{tpu_custom_call.1} parent=1 // pred_check
      _
    $region11: #{tpu_custom_call.1} parent=1 // pred_check_branch
      %39 = sbr.rel (0) target = $region13
    $region12: #{tpu_custom_call.1} parent=1 // pred_region
      %s41 = ssub.s32 512, 512
      %42 = vsyncadd [#allocation6], %s41
      %s43 = sshll.u32 [#allocation7], 4
      %s44 = int_to_ptr.vmem [resolvable:$true] %s43
      %49 = dma.hbm_to_vmem [thread:$0]  %s2, 512, %s44, [#allocation6], 64, 64, 4
    $region13: #{tpu_custom_call.1} parent=1 // pred_fallthru
      _
    // Predicated region
    $region14: #{tpu_custom_call.1} parent=1 // pred_check
      _
    $region15: #{tpu_custom_call.1} parent=1 // pred_check_branch
      %51 = sbr.rel (0) target = $region17
    $region16: #{tpu_custom_call.1} parent=1 // pred_region
      %s53 = ssub.s32 2048, 2048
      %54 = vsyncadd [#allocation9], %s53
      %s55 = sshll.u32 [#allocation8], 4
      %s56 = int_to_ptr.vmem [resolvable:$true] %s55
      %61 = dma.hbm_to_vmem [thread:$0]  %s3, 2048, %s56, [#allocation9], 64, 64, 4
    $region17: #{tpu_custom_call.1} parent=1 // pred_fallthru
      _
    // Predicated region
    $region18: #{tpu_custom_call.1} parent=1 // pred_check
      _
    $region19: #{tpu_custom_call.1} parent=1 // pred_check_branch
      %63 = sbr.rel (0) target = $region21
    $region20: #{tpu_custom_call.1} parent=1 // pred_region
      _
    $region21: #{tpu_custom_call.1} parent=1 // pred_fallthru
      _
    // Predicated region
    $region22: #{tpu_custom_call.1} parent=1 // pred_check
      _
    $region23: #{tpu_custom_call.1} parent=1 // pred_check_branch
      %65 = sbr.rel (0) target = $region25
    $region24: #{tpu_custom_call.1} parent=1 // pred_region
      %66 = dma.done [#allocation3], 512
    $region25: #{tpu_custom_call.1} parent=1 // pred_fallthru
      _
    // Predicated region
    $region26: #{tpu_custom_call.1} parent=1 // pred_check
      _
    $region27: #{tpu_custom_call.1} parent=1 // pred_check_branch
      %68 = sbr.rel (0) target = $region29
    $region28: #{tpu_custom_call.1} parent=1 // pred_region
      %69 = dma.done [#allocation6], 512
    $region29: #{tpu_custom_call.1} parent=1 // pred_fallthru
      _
    // Predicated region
    $region30: #{tpu_custom_call.1} parent=1 // pred_check
      _
    $region31: #{tpu_custom_call.1} parent=1 // pred_check_branch
      %71 = sbr.rel (0) target = $region33
    $region32: #{tpu_custom_call.1} parent=1 // pred_region
      %72 = dma.done [#allocation6], 512
    $region33: #{tpu_custom_call.1} parent=1 // pred_fallthru
      _
    // Predicated region
    $region34: #{tpu_custom_call.1} parent=1 // pred_check
      _
    $region35: #{tpu_custom_call.1} parent=1 // pred_check_branch
      %74 = sbr.rel (0) target = $region37
    $region36: #{tpu_custom_call.1} parent=1 // pred_region
      %75 = dma.done [#allocation9], 2048
    $region37: #{tpu_custom_call.1} parent=1 // pred_fallthru
      _
    %v77 = vld [vmem:[#allocation2] sm:$0xf]
    %v78 = vld [vmem:[#allocation2 + $0x4] sm:$0xf]
    %v79 = vld [vmem:[#allocation2 + $0x8] sm:$0xf]
    %v80 = vld [vmem:[#allocation2 + $0xc] sm:$0xf]
    %v81 = vld [vmem:[#allocation2 + $0x10] sm:$0xf]
    %v82 = vld [vmem:[#allocation2 + $0x14] sm:$0xf]
    %v83 = vld [vmem:[#allocation2 + $0x18] sm:$0xf]
    %v84 = vld [vmem:[#allocation2 + $0x1c] sm:$0xf]
    %v85 = vld [vmem:[#allocation5] sm:$0xf]
    %v86 = vld [vmem:[#allocation5 + $0x4] sm:$0xf]
    %v87 = vld [vmem:[#allocation5 + $0x8] sm:$0xf]
    %v88 = vld [vmem:[#allocation5 + $0xc] sm:$0xf]
    %v89 = vld [vmem:[#allocation5 + $0x10] sm:$0xf]
    %v90 = vld [vmem:[#allocation5 + $0x14] sm:$0xf]
    %v91 = vld [vmem:[#allocation5 + $0x18] sm:$0xf]
    %v92 = vld [vmem:[#allocation5 + $0x1c] sm:$0xf]
    %v101 = vunpack.c.l.b16 %v77
    %v102 = vunpack.c.l.b16 %v78
    %v103 = vunpack.c.l.b16 %v79
    %v104 = vunpack.c.l.b16 %v80
    %v105 = vunpack.c.l.b16 %v81
    %v106 = vunpack.c.l.b16 %v82
    %v107 = vunpack.c.l.b16 %v83
    %v108 = vunpack.c.l.b16 %v84
    %v109 = vpack.c.b16 %v102, %v101
    %v110 = vpack.c.b16 %v104, %v103
    %v111 = vpack.c.b16 %v106, %v105
    %v112 = vpack.c.b16 %v108, %v107
    %v121 = vunpack.c.l.b16 %v85
    %v122 = vunpack.c.l.b16 %v86
    %v123 = vunpack.c.l.b16 %v87
    %v124 = vunpack.c.l.b16 %v88
    %v125 = vunpack.c.l.b16 %v89
    %v126 = vunpack.c.l.b16 %v90
    %v127 = vunpack.c.l.b16 %v91
    %v128 = vunpack.c.l.b16 %v92
    %v129 = vpack.c.b16 %v122, %v121
    %v130 = vpack.c.b16 %v124, %v123
    %v131 = vpack.c.b16 %v126, %v125
    %v132 = vpack.c.b16 %v128, %v127
    %vm137 = vcmask 523264
    %v139 = vsel %vm137, %v109, 0
    %v142 = vsel %vm137, %v110, 0
    %v145 = vsel %vm137, %v111, 0
    %v148 = vsel %vm137, %v112, 0
    %150 = vmatprep.subr.bf16.mxu0 0
    %151 = vmatpush1.bf16.msra.mxu0 0
    %152 = vmatprep.subr.bf16.mxu0 0
    %153 = vmatpush1.bf16.msra.mxu0 0
    %154 = vmatprep.subr.bf16.mxu0 0
    %155 = vmatpush1.bf16.msra.mxu0 0
    %156 = vmatprep.subr.bf16.mxu0 0
    %157 = vmatpush1.bf16.msra.mxu0 0
    %158 = vmatprep.subr.bf16.mxu0 0
    %159 = vmatpush1.bf16.msra.mxu0 %v132
    %160 = vmatprep.subr.bf16.mxu0 0
    %161 = vmatpush1.bf16.msra.mxu0 %v131
    %162 = vmatprep.subr.bf16.mxu0 0
    %163 = vmatpush1.bf16.msra.mxu0 %v130
    %164 = vmatprep.subr.bf16.mxu0 0
    %165 = vmatpush1.bf16.msra.mxu0 %v129
    %166 = vmatprep.subr.bf16.mxu0 0
    %167 = vmatpush2.bf16.msra.mxu0 0
    %168 = vmatprep.subr.bf16.mxu0 0
    %169 = vmatpush2.bf16.msra.mxu0 0
    %170 = vmatprep.subr.bf16.mxu0 0
    %171 = vmatpush2.bf16.msra.mxu0 0
    %172 = vmatprep.subr.bf16.mxu0 0
    %173 = vmatpush2.bf16.msra.mxu0 0
    %174 = vmatprep.subr.bf16.mxu0 0
    %175 = vmatpush2.bf16.msra.mxu0 0
    %176 = vmatprep.subr.bf16.mxu0 0
    %177 = vmatpush2.bf16.msra.mxu0 0
    %178 = vmatprep.subr.bf16.mxu0 0
    %179 = vmatpush2.bf16.msra.mxu0 0
    %180 = vmatprep.subr.bf16.mxu0 0
    %181 = vmatpush2.bf16.msra.mxu0 0
    %182 = vmatprep.mubr.bf16.mxu0 0
    %183 = vmatmul.mubr.bf16.gmra.mxu0 %v139
    %v184 = vpop.f32.mrf.mxu0
    %v185 = vadd.f32 0.0, %v184
    %v186 = vpop.f32.mrf.mxu0
    %v187 = vpop.f32.mrf.mxu0
    %v188 = vadd.f32 0.0, %v187
    %v189 = vpop.f32.mrf.mxu0
    %190 = vmatprep.mubr.bf16.mxu0 0
    %191 = vmatmul.mubr.bf16.gmra.mxu0 %v142
    %v192 = vpop.f32.mrf.mxu0
    %v193 = vadd.f32 0.0, %v192
    %v194 = vpop.f32.mrf.mxu0
    %v195 = vpop.f32.mrf.mxu0
    %v196 = vadd.f32 0.0, %v195
    %v197 = vpop.f32.mrf.mxu0
    %198 = vmatprep.mubr.bf16.mxu0 0
    %199 = vmatmul.mubr.bf16.gmra.mxu0 %v145
    %v200 = vpop.f32.mrf.mxu0
    %v201 = vadd.f32 0.0, %v200
    %v202 = vpop.f32.mrf.mxu0
    %v203 = vpop.f32.mrf.mxu0
    %v204 = vadd.f32 0.0, %v203
    %v205 = vpop.f32.mrf.mxu0
    %206 = vmatprep.mubr.bf16.mxu0 0
    %207 = vmatmul.mubr.bf16.gmra.mxu0 %v148
    %v208 = vpop.f32.mrf.mxu0
    %v209 = vadd.f32 0.0, %v208
    %v210 = vpop.f32.mrf.mxu0
    %v211 = vpop.f32.mrf.mxu0
    %v212 = vadd.f32 0.0, %v211
    %v213 = vpop.f32.mrf.mxu0
    %214 = vdwg.mxu0
    %v215 = vpack.c.bf16 %v188, %v185
    %v216 = vpack.c.bf16 %v196, %v193
    %v217 = vpack.c.bf16 %v204, %v201
    %v218 = vpack.c.bf16 %v212, %v209
    %v219 = vld [vmem:[#allocation7] sm:$0xf]
    %v220 = vld [vmem:[#allocation7 + $0x4] sm:$0xf]
    %v221 = vld [vmem:[#allocation7 + $0x8] sm:$0xf]
    %v222 = vld [vmem:[#allocation7 + $0xc] sm:$0xf]
    %v223 = vld [vmem:[#allocation7 + $0x10] sm:$0xf]
    %v224 = vld [vmem:[#allocation7 + $0x14] sm:$0xf]
    %v225 = vld [vmem:[#allocation7 + $0x18] sm:$0xf]
    %v226 = vld [vmem:[#allocation7 + $0x1c] sm:$0xf]
    %v235 = vunpack.c.l.b16 %v219
    %v236 = vunpack.c.l.b16 %v220
    %v237 = vunpack.c.l.b16 %v221
    %v238 = vunpack.c.l.b16 %v222
    %v239 = vunpack.c.l.b16 %v223
    %v240 = vunpack.c.l.b16 %v224
    %v241 = vunpack.c.l.b16 %v225
    %v242 = vunpack.c.l.b16 %v226
    %v243 = vpack.c.b16 %v236, %v235
    %v244 = vpack.c.b16 %v238, %v237
    %v245 = vpack.c.b16 %v240, %v239
    %v246 = vpack.c.b16 %v242, %v241
    %v251 = vld [vmem:[#allocation8] sm:$0xf]
    %v252 = vld [vmem:[#allocation8 + $0x4] sm:$0xf]
    %v253 = vld [vmem:[#allocation8 + $0x8] sm:$0xf]
    %v254 = vld [vmem:[#allocation8 + $0xc] sm:$0xf]
    %v255 = vld [vmem:[#allocation8 + $0x10] sm:$0xf]
    %v256 = vld [vmem:[#allocation8 + $0x14] sm:$0xf]
    %v257 = vld [vmem:[#allocation8 + $0x18] sm:$0xf]
    %v258 = vld [vmem:[#allocation8 + $0x1c] sm:$0xf]
    %v259 = vld [vmem:[#allocation8 + $0x20] sm:$0xf]
    %v260 = vld [vmem:[#allocation8 + $0x24] sm:$0xf]
    %v261 = vld [vmem:[#allocation8 + $0x28] sm:$0xf]
    %v262 = vld [vmem:[#allocation8 + $0x2c] sm:$0xf]
    %v263 = vld [vmem:[#allocation8 + $0x30] sm:$0xf]
    %v264 = vld [vmem:[#allocation8 + $0x34] sm:$0xf]
    %v265 = vld [vmem:[#allocation8 + $0x38] sm:$0xf]
    %v266 = vld [vmem:[#allocation8 + $0x3c] sm:$0xf]
    %v267 = vld [vmem:[#allocation8 + $0x40] sm:$0xf]
    %v268 = vld [vmem:[#allocation8 + $0x44] sm:$0xf]
    %v269 = vld [vmem:[#allocation8 + $0x48] sm:$0xf]
    %v270 = vld [vmem:[#allocation8 + $0x4c] sm:$0xf]
    %v271 = vld [vmem:[#allocation8 + $0x50] sm:$0xf]
    %v272 = vld [vmem:[#allocation8 + $0x54] sm:$0xf]
    %v273 = vld [vmem:[#allocation8 + $0x58] sm:$0xf]
    %v274 = vld [vmem:[#allocation8 + $0x5c] sm:$0xf]
    %v275 = vld [vmem:[#allocation8 + $0x60] sm:$0xf]
    %v276 = vld [vmem:[#allocation8 + $0x64] sm:$0xf]
    %v277 = vld [vmem:[#allocation8 + $0x68] sm:$0xf]
    %v278 = vld [vmem:[#allocation8 + $0x6c] sm:$0xf]
    %v279 = vld [vmem:[#allocation8 + $0x70] sm:$0xf]
    %v280 = vld [vmem:[#allocation8 + $0x74] sm:$0xf]
    %v281 = vld [vmem:[#allocation8 + $0x78] sm:$0xf]
    %v282 = vld [vmem:[#allocation8 + $0x7c] sm:$0xf]
    %v283 = vld [vmem:[%s4] sm:$0x1]
    %v285 = vlaneseq
    %v286 = vshrl.u32 %v285, 7
    %v287 = vsub.s32 0, %v286
    %v288 = vrot.slane %v283, %v287
    %v322 = vunpack.c.l.b16 %v251
    %v323 = vunpack.c.l.b16 %v252
    %v324 = vunpack.c.l.b16 %v253
    %v325 = vunpack.c.l.b16 %v254
    %v326 = vunpack.c.l.b16 %v255
    %v327 = vunpack.c.l.b16 %v256
    %v328 = vunpack.c.l.b16 %v257
    %v329 = vunpack.c.l.b16 %v258
    %v330 = vunpack.c.l.b16 %v259
    %v331 = vunpack.c.l.b16 %v260
    %v332 = vunpack.c.l.b16 %v261
    %v333 = vunpack.c.l.b16 %v262
    %v334 = vunpack.c.l.b16 %v263
    %v335 = vunpack.c.l.b16 %v264
    %v336 = vunpack.c.l.b16 %v265
    %v337 = vunpack.c.l.b16 %v266
    %v338 = vunpack.c.l.b16 %v267
    %v339 = vunpack.c.l.b16 %v268
    %v340 = vunpack.c.l.b16 %v269
    %v341 = vunpack.c.l.b16 %v270
    %v342 = vunpack.c.l.b16 %v271
    %v343 = vunpack.c.l.b16 %v272
    %v344 = vunpack.c.l.b16 %v273
    %v345 = vunpack.c.l.b16 %v274
    %v346 = vunpack.c.l.b16 %v275
    %v347 = vunpack.c.l.b16 %v276
    %v348 = vunpack.c.l.b16 %v277
    %v349 = vunpack.c.l.b16 %v278
    %v350 = vunpack.c.l.b16 %v279
    %v351 = vunpack.c.l.b16 %v280
    %v352 = vunpack.c.l.b16 %v281
    %v353 = vunpack.c.l.b16 %v282
    %v354 = vpack.c.b16 %v323, %v322
    %v355 = vpack.c.b16 %v325, %v324
    %v356 = vpack.c.b16 %v327, %v326
    %v357 = vpack.c.b16 %v329, %v328
    %v358 = vpack.c.b16 %v331, %v330
    %v359 = vpack.c.b16 %v333, %v332
    %v360 = vpack.c.b16 %v335, %v334
    %v361 = vpack.c.b16 %v337, %v336
    %v362 = vpack.c.b16 %v339, %v338
    %v363 = vpack.c.b16 %v341, %v340
    %v364 = vpack.c.b16 %v343, %v342
    %v365 = vpack.c.b16 %v345, %v344
    %v366 = vpack.c.b16 %v347, %v346
    %v367 = vpack.c.b16 %v349, %v348
    %v368 = vpack.c.b16 %v351, %v350
    %v369 = vpack.c.b16 %v353, %v352
    %386 = vmatprep.subr.bf16.mxu0 0
    %387 = vmatpush1.bf16.msra.mxu0 %v361
    %388 = vmatprep.subr.bf16.mxu0 0
    %389 = vmatpush1.bf16.msra.mxu0 %v360
    %390 = vmatprep.subr.bf16.mxu0 0
    %391 = vmatpush1.bf16.msra.mxu0 %v359
    %392 = vmatprep.subr.bf16.mxu0 0
    %393 = vmatpush1.bf16.msra.mxu0 %v358
    %394 = vmatprep.subr.bf16.mxu0 0
    %395 = vmatpush1.bf16.msra.mxu0 %v357
    %396 = vmatprep.subr.bf16.mxu0 0
    %397 = vmatpush1.bf16.msra.mxu0 %v356
    %398 = vmatprep.subr.bf16.mxu0 0
    %399 = vmatpush1.bf16.msra.mxu0 %v355
    %400 = vmatprep.subr.bf16.mxu0 0
    %401 = vmatpush1.bf16.msra.mxu0 %v354
    %402 = vmatprep.subr.bf16.mxu0 0
    %403 = vmatpush2.bf16.msra.mxu0 %v369
    %404 = vmatprep.subr.bf16.mxu0 0
    %405 = vmatpush2.bf16.msra.mxu0 %v368
    %406 = vmatprep.subr.bf16.mxu0 0
    %407 = vmatpush2.bf16.msra.mxu0 %v367
    %408 = vmatprep.subr.bf16.mxu0 0
    %409 = vmatpush2.bf16.msra.mxu0 %v366
    %410 = vmatprep.subr.bf16.mxu0 0
    %411 = vmatpush2.bf16.msra.mxu0 %v365
    %412 = vmatprep.subr.bf16.mxu0 0
    %413 = vmatpush2.bf16.msra.mxu0 %v364
    %414 = vmatprep.subr.bf16.mxu0 0
    %415 = vmatpush2.bf16.msra.mxu0 %v363
    %416 = vmatprep.subr.bf16.mxu0 0
    %417 = vmatpush2.bf16.msra.mxu0 %v362
    %418 = vmatprep.mubr.bf16.mxu0 %v243
    %419 = vmatmul.mubr.bf16.gmra.mxu0 %v215
    %v420 = vpop.f32.mrf.mxu0
    %v421 = vadd.f32 %v288, %v420
    %v422 = vpop.f32.mrf.mxu0
    %v423 = vpop.f32.mrf.mxu0
    %v424 = vadd.f32 %v288, %v423
    %v425 = vpop.f32.mrf.mxu0
    %426 = vmatprep.mubr.bf16.mxu0 %v244
    %427 = vmatmul.mubr.bf16.gmra.mxu0 %v216
    %v428 = vpop.f32.mrf.mxu0
    %v429 = vadd.f32 %v288, %v428
    %v430 = vpop.f32.mrf.mxu0
    %v431 = vpop.f32.mrf.mxu0
    %v432 = vadd.f32 %v288, %v431
    %v433 = vpop.f32.mrf.mxu0
    %434 = vmatprep.mubr.bf16.mxu0 %v245
    %435 = vmatmul.mubr.bf16.gmra.mxu0 %v217
    %v436 = vpop.f32.mrf.mxu0
    %v437 = vadd.f32 %v288, %v436
    %v438 = vpop.f32.mrf.mxu0
    %v439 = vpop.f32.mrf.mxu0
    %v440 = vadd.f32 %v288, %v439
    %v441 = vpop.f32.mrf.mxu0
    %442 = vmatprep.mubr.bf16.mxu0 %v246
    %443 = vmatmul.mubr.bf16.gmra.mxu0 %v218
    %v444 = vpop.f32.mrf.mxu0
    %v445 = vadd.f32 %v288, %v444
    %v446 = vpop.f32.mrf.mxu0
    %v447 = vpop.f32.mrf.mxu0
    %v448 = vadd.f32 %v288, %v447
    %v449 = vpop.f32.mrf.mxu0
    %450 = vdwg.mxu0
    %v451 = vmax.f32 %v421, 0.0
    %v452 = vmax.f32 %v424, 0.0
    %v453 = vmax.f32 %v429, 0.0
    %v454 = vmax.f32 %v432, 0.0
    %v455 = vmax.f32 %v437, 0.0
    %v456 = vmax.f32 %v440, 0.0
    %v457 = vmax.f32 %v445, 0.0
    %v458 = vmax.f32 %v448, 0.0
    %v459 = vpack.c.bf16 %v452, %v451
    %v460 = vpack.c.bf16 %v454, %v453
    %v461 = vpack.c.bf16 %v456, %v455
    %v462 = vpack.c.bf16 %v458, %v457
    %v467 = vunpack.c.l.b16 %v459
    %v468 = vunpack.c.h.b16 %v459
    %v469 = vunpack.c.l.b16 %v460
    %v470 = vunpack.c.h.b16 %v460
    %v471 = vunpack.c.l.b16 %v461
    %v472 = vunpack.c.h.b16 %v461
    %v473 = vunpack.c.l.b16 %v462
    %v474 = vunpack.c.h.b16 %v462
    %v475 = vpack.c.b16 %v467, %v467
    %v476 = vpack.c.b16 %v468, %v468
    %v477 = vpack.c.b16 %v469, %v469
    %v478 = vpack.c.b16 %v470, %v470
    %v479 = vpack.c.b16 %v471, %v471
    %v480 = vpack.c.b16 %v472, %v472
    %v481 = vpack.c.b16 %v473, %v473
    %v482 = vpack.c.b16 %v474, %v474
    %491 = vst [vmem:[#allocation10] sm:$0xf] %v475
    %492 = vst [vmem:[#allocation10 + $0x4] sm:$0xf] %v476
    %493 = vst [vmem:[#allocation10 + $0x8] sm:$0xf] %v477
    %494 = vst [vmem:[#allocation10 + $0xc] sm:$0xf] %v478
    %495 = vst [vmem:[#allocation10 + $0x10] sm:$0xf] %v479
    %496 = vst [vmem:[#allocation10 + $0x14] sm:$0xf] %v480
    %497 = vst [vmem:[#allocation10 + $0x18] sm:$0xf] %v481
    %498 = vst [vmem:[#allocation10 + $0x1c] sm:$0xf] %v482
    // Predicated region
    $region38: #{tpu_custom_call.1} parent=1 // pred_check
      _
    $region39: #{tpu_custom_call.1} parent=1 // pred_check_branch
      %500 = sbr.rel (0) target = $region41
    $region40: #{tpu_custom_call.1} parent=1 // pred_region
      %s502 = ssub.s32 512, 512
      %503 = vsyncadd [#allocation4], %s502
      %s504 = sshll.u32 [#allocation10], 4
      %s505 = int_to_ptr.vmem [resolvable:$true] %s504
      %510 = dma.vmem_to_hbm [thread:$0]  %s505, 512, %s5, [#allocation4], 64, 64, 4
    $region41: #{tpu_custom_call.1} parent=1 // pred_fallthru
      _
    // Predicated region
    $region42: #{tpu_custom_call.1} parent=1 // pred_check
      _
    $region43: #{tpu_custom_call.1} parent=1 // pred_check_branch
      %512 = sbr.rel (0) target = $region45
    $region44: #{tpu_custom_call.1} parent=1 // pred_region
      %513 = dma.done [#allocation4], 512
    $region45: #{tpu_custom_call.1} parent=1 // pred_fallthru
      _
    %514 = vsyncpa [#allocation3], 1
    %515 = vsyncpa [#allocation6], 1
    %516 = vsyncpa [#allocation9], 1
    %517 = vsyncpa [#allocation4], 1

</llo_original>
